<compile_context>
chip_gen: v5e
topology: v5e:2x2
jax: 0.10.0
libtpu: 0.0.40
codegen_flags: <defaults>
</compile_context>

<pallas_src>
import functools

import jax
import jax.numpy as jnp
from jax.experimental import pallas as pl
from jax.experimental.pallas import tpu as pltpu

LANE = 128
SUBLANE = 8


def _round_up(n, m):
    return ((n + m - 1) // m) * m


def mlp_kernel(x_ref, w1_ref, b1_ref, w2_ref, b2_ref, o_ref):
    # fc1 + ReLU: (tb, 100) @ (100, 128) on the MXU (f32 accumulation),
    # bias + ReLU on the VPU.
    h = jnp.dot(x_ref[...], w1_ref[...], preferred_element_type=jnp.float32)
    h = jnp.maximum(h + b1_ref[...], 0.0)
    # fc2: (tb, 128) @ (128, 10); narrow output stored directly.
    y = jnp.dot(h, w2_ref[...], preferred_element_type=jnp.float32)
    o_ref[...] = (y + b2_ref[...]).astype(o_ref.dtype)


def prepare_padded_params(w1, b1, w2, b2):
    """Pad the hidden dim (50 -> 128 lanes) ONCE at model init.

    Zero padding is numerically exact: zero columns of W1 / zero entries of b1
    give zero hidden activations, ReLU(0) = 0, and zero rows of W2 contribute
    nothing to the output. The input dim (100) and output dim (10) are left
    unpadded; the kernel handles them as full-array block dims.
    """
    d_hid = w1.shape[1]
    d_out = w2.shape[1]
    d_hid_p = _round_up(d_hid, LANE)
    f32 = jnp.float32
    w1_p = jnp.pad(w1.astype(f32), ((0, 0), (0, d_hid_p - d_hid)))           # (100, 128)
    b1_p = jnp.pad(b1.astype(f32), (0, d_hid_p - d_hid)).reshape(1, d_hid_p)  # (1, 128)
    w2_p = jnp.pad(w2.astype(f32), ((0, d_hid_p - d_hid), (0, 0)))            # (128, 10)
    b2_p = b2.astype(f32).reshape(1, d_out)                                   # (1, 10)
    return w1_p, b1_p, w2_p, b2_p


@functools.partial(jax.jit, static_argnames=("block_b",))
def simple_nn_forward(x, w1_p, b1_p, w2_p, b2_p, *, block_b=4096):
    """x: (B, 100) f32; params already padded by prepare_padded_params()."""
    B, d_in = x.shape
    d_hid_p = w1_p.shape[1]
    d_out = w2_p.shape[1]

    # Batch: pad only up to the next multiple of 8 (sublane); <8 wasted rows.
    b_pad = _round_up(B, SUBLANE)
    x_p = x.astype(jnp.float32)
    if b_pad != B:
        x_p = jnp.pad(x_p, ((0, b_pad - B), (0, 0)))

    # Tile selection: biggest sublane-aligned tile <= block_b, but keep at
    # least 2 grid steps whenever the batch allows it so v7x's 2 TensorCores
    # (grid axis marked "parallel") both get work. Harmless on v5e/v6e.
    tb = min(_round_up(block_b, SUBLANE), b_pad)
    if b_pad >= 2 * SUBLANE and pl.cdiv(b_pad, tb) < 2:
        tb = _round_up(pl.cdiv(b_pad, 2), SUBLANE)
    grid = (pl.cdiv(b_pad, tb),)  # partial last block is masked by Pallas

    cost = pl.CostEstimate(
        flops=2 * b_pad * (d_in * d_hid_p + d_hid_p * d_out),
        transcendentals=0,
        bytes_accessed=4 * (b_pad * d_in + d_in * d_hid_p + d_hid_p * d_out
                            + b_pad * d_out),
    )

    out = pl.pallas_call(
        mlp_kernel,
        out_shape=jax.ShapeDtypeStruct((b_pad, d_out), jnp.float32),
        grid=grid,
        in_specs=[
            # Activations stream one batch tile per grid step; last dim (100)
            # equals the full array dim -> legal, no lane padding in HBM.
            pl.BlockSpec((tb, d_in), lambda i: (i, 0)),
            # Weights / biases: constant block index -> resident in VMEM,
            # DMA'd once for the whole grid.
            pl.BlockSpec((d_in, d_hid_p), lambda i: (0, 0)),
            pl.BlockSpec((1, d_hid_p), lambda i: (0, 0)),
            pl.BlockSpec((d_hid_p, d_out), lambda i: (0, 0)),
            pl.BlockSpec((1, d_out), lambda i: (0, 0)),
        ],
        # Narrow (tb, 10) output block: last dim equals full array dim. Trades
        # masked stores for ~12.8x less HBM writeback + no wrapper lane-slice.
        out_specs=pl.BlockSpec((tb, d_out), lambda i: (i, 0)),
        compiler_params=pltpu.CompilerParams(
            dimension_semantics=("parallel",),
            vmem_limit_bytes=32 * 1024 * 1024,  # safe on v7x (64 MiB/TC) and v5e (16 MiB default)
        ),
        cost_estimate=cost,
    )(x_p, w1_p, b1_p, w2_p, b2_p)

    # Only the (small) batch padding needs slicing off; no-op when B % 8 == 0.
    return out if b_pad == B else out[:B]


def _reference(x, w1, b1, w2, b2):
    h = jnp.maximum(x @ w1 + b1, 0.0)
    return h @ w2 + b2


if __name__ == "__main__":
    key = jax.random.PRNGKey(0)
    k_x, k_w1, k_b1, k_w2, k_b2 = jax.random.split(key, 5)

    B, D_IN, D_HID, D_OUT = 8, 100, 50, 10

    x = jax.random.normal(k_x, (B, D_IN), dtype=jnp.float32)

    # Deterministic init mimicking nn.Linear's uniform(-1/sqrt(fan_in), 1/sqrt(fan_in)).
    bound1 = 1.0 / jnp.sqrt(D_IN)
    w1 = jax.random.uniform(k_w1, (D_IN, D_HID), jnp.float32, -bound1, bound1)
    b1 = jax.random.uniform(k_b1, (D_HID,), jnp.float32, -bound1, bound1)
    bound2 = 1.0 / jnp.sqrt(D_HID)
    w2 = jax.random.uniform(k_w2, (D_IN // 2, D_OUT), jnp.float32, -bound2, bound2)
    b2 = jax.random.uniform(k_b2, (D_OUT,), jnp.float32, -bound2, bound2)

    # Pad weights once at init (hoisted out of the forward path).
    params = prepare_padded_params(w1, b1, w2, b2)

    out = simple_nn_forward(x, *params)
    jax.block_until_ready(out)

    ref = _reference(x, w1, b1, w2, b2)
    assert out.shape == (B, D_OUT)
    assert jnp.allclose(out, ref, atol=1e-5, rtol=1e-5), "mismatch vs reference"

    # Batch that is not a multiple of 8 and forces a masked partial last block.
    B2 = 20
    x2 = jax.random.normal(k_x, (B2, D_IN), dtype=jnp.float32)
    out2 = simple_nn_forward(x2, *params)
    jax.block_until_ready(out2)
    ref2 = _reference(x2, w1, b1, w2, b2)
    assert out2.shape == (B2, D_OUT)
    assert jnp.allclose(out2, ref2, atol=1e-5, rtol=1e-5), "mismatch vs reference (partial block)"

    # Larger batch exercising the multi-step (>=2 grid steps) tiled path.
    B3 = 300
    x3 = jax.random.normal(k_x, (B3, D_IN), dtype=jnp.float32)
    out3 = simple_nn_forward(x3, *params)
    jax.block_until_ready(out3)
    ref3 = _reference(x3, w1, b1, w2, b2)
    assert out3.shape == (B3, D_OUT)
    assert jnp.allclose(out3, ref3, atol=1e-5, rtol=1e-5), "mismatch vs reference (tiled)"

    print("KERNEL_OK")
</pallas_src>

<mosaic_0001>
module attributes {stable_mosaic.version = 11 : i64} {
  func.func @mlp_kernel(%arg0: i32, %arg1: memref<8x100xf32, #tpu.memory_space<vmem>>, %arg2: memref<100x128xf32, #tpu.memory_space<vmem>>, %arg3: memref<1x128xf32, #tpu.memory_space<vmem>>, %arg4: memref<128x10xf32, #tpu.memory_space<vmem>>, %arg5: memref<1x10xf32, #tpu.memory_space<vmem>>, %arg6: memref<8x10xf32, #tpu.memory_space<vmem>>) attributes {dimension_semantics = [#tpu.dimension_semantics<parallel>], iteration_bounds = array<i64: 1>, scalar_prefetch = 0 : i64, scratch_operands = 0 : i64, tpu.core_type = #tpu.core_type<tc>, window_params = [{transform_indices = @transform_0, window_bounds = array<i64: 8, 100>}, {pipeline_mode = #tpu.pipeline_mode<synchronous>, transform_indices = @transform_1, window_bounds = array<i64: 100, 128>}, {pipeline_mode = #tpu.pipeline_mode<synchronous>, transform_indices = @transform_2, window_bounds = array<i64: 1, 128>}, {pipeline_mode = #tpu.pipeline_mode<synchronous>, transform_indices = @transform_3, window_bounds = array<i64: 128, 10>}, {pipeline_mode = #tpu.pipeline_mode<synchronous>, transform_indices = @transform_4, window_bounds = array<i64: 1, 10>}, {transform_indices = @transform_5, window_bounds = array<i64: 8, 10>}]} {
    %c0 = arith.constant 0 : index
    %c0_0 = arith.constant 0 : index
    %0 = vector.load %arg1[%c0, %c0_0] : memref<8x100xf32, #tpu.memory_space<vmem>>, vector<8x100xf32>
    %c0_1 = arith.constant 0 : index
    %c0_2 = arith.constant 0 : index
    %1 = vector.load %arg2[%c0_1, %c0_2] : memref<100x128xf32, #tpu.memory_space<vmem>>, vector<100x128xf32>
    %cst = arith.constant dense<0.000000e+00> : vector<8x128xf32>
    %2 = tpu.matmul %0, %1, %cst {dimension_numbers = #tpu.dot_dimension_numbers<[1], [0], [0], [1], [0, 0, 1, 1], [], []>} : vector<8x100xf32>, vector<100x128xf32>, vector<8x128xf32> -> vector<8x128xf32>
    %c0_3 = arith.constant 0 : index
    %c0_4 = arith.constant 0 : index
    %3 = vector.load %arg3[%c0_3, %c0_4] : memref<1x128xf32, #tpu.memory_space<vmem>>, vector<1x128xf32>
    %4 = vector.broadcast %3 : vector<1x128xf32> to vector<8x128xf32>
    %5 = arith.addf %2, %4 : vector<8x128xf32>
    %cst_5 = arith.constant 0.000000e+00 : f32
    %6 = vector.broadcast %cst_5 : f32 to vector<8x128xf32>
    %7 = arith.maximumf %5, %6 : vector<8x128xf32>
    %c0_6 = arith.constant 0 : index
    %c0_7 = arith.constant 0 : index
    %8 = vector.load %arg4[%c0_6, %c0_7] : memref<128x10xf32, #tpu.memory_space<vmem>>, vector<128x10xf32>
    %cst_8 = arith.constant dense<0.000000e+00> : vector<8x10xf32>
    %9 = tpu.matmul %7, %8, %cst_8 {dimension_numbers = #tpu.dot_dimension_numbers<[1], [0], [0], [1], [0, 0, 1, 1], [], []>} : vector<8x128xf32>, vector<128x10xf32>, vector<8x10xf32> -> vector<8x10xf32>
    %c0_9 = arith.constant 0 : index
    %c0_10 = arith.constant 0 : index
    %10 = vector.load %arg5[%c0_9, %c0_10] : memref<1x10xf32, #tpu.memory_space<vmem>>, vector<1x10xf32>
    %11 = vector.broadcast %10 : vector<1x10xf32> to vector<8x10xf32>
    %12 = arith.addf %9, %11 : vector<8x10xf32>
    %c0_11 = arith.constant 0 : index
    %c0_12 = arith.constant 0 : index
    %13 = vector.load %arg6[%c0_11, %c0_12] : memref<8x10xf32, #tpu.memory_space<vmem>>, vector<8x10xf32>
    tpu.vector_store %arg6[%c0_11, %c0_12], %12 {strides = array<i32>} : memref<8x10xf32, #tpu.memory_space<vmem>>, vector<8x10xf32>,
    return
  }
  func.func @transform_0(%arg0: i32) -> (i32, i32) {
    %c0_i32 = arith.constant 0 : i32
    %c0_i32_0 = arith.constant 0 : i32
    return %arg0, %c0_i32 : i32, i32
  }
  func.func @transform_1(%arg0: i32) -> (i32, i32) {
    %c0_i32 = arith.constant 0 : i32
    %c0_i32_0 = arith.constant 0 : i32
    %c0_i32_1 = arith.constant 0 : i32
    return %c0_i32, %c0_i32_0 : i32, i32
  }
  func.func @transform_2(%arg0: i32) -> (i32, i32) {
    %c0_i32 = arith.constant 0 : i32
    %c0_i32_0 = arith.constant 0 : i32
    %c0_i32_1 = arith.constant 0 : i32
    return %c0_i32, %c0_i32_0 : i32, i32
  }
  func.func @transform_3(%arg0: i32) -> (i32, i32) {
    %c0_i32 = arith.constant 0 : i32
    %c0_i32_0 = arith.constant 0 : i32
    %c0_i32_1 = arith.constant 0 : i32
    return %c0_i32, %c0_i32_0 : i32, i32
  }
  func.func @transform_4(%arg0: i32) -> (i32, i32) {
    %c0_i32 = arith.constant 0 : i32
    %c0_i32_0 = arith.constant 0 : i32
    %c0_i32_1 = arith.constant 0 : i32
    return %c0_i32, %c0_i32_0 : i32, i32
  }
  func.func @transform_5(%arg0: i32) -> (i32, i32) {
    %c0_i32 = arith.constant 0 : i32
    %c0_i32_0 = arith.constant 0 : i32
    return %arg0, %c0_i32 : i32, i32
  }
}

</mosaic_0001>

<llo_original>
// kernel: simple_nn_forward.1
$region0: #{simple_nn_forward.1}
  #allocation0 [shape = 'u32[]', space=smem, size = 0x4, offset = 0x4, fixed_abs, tag = 'smem constant byte address 0x4 - core index']
  #allocation1 [shape = 'u32[72,128]{1,0:T(1,128)}', space=vmem, size = 0x9000, scoped, tag = 'internal scratch']
  %s0 = inlined_call_operand.vmem [shape: f32[8,100], index: 0, kind: input, shape index: {}]
  %s1 = inlined_call_operand.vmem [shape: f32[100,128], index: 1, kind: input, shape index: {}]
  %s2 = inlined_call_operand.vmem [shape: f32[1,128], index: 2, kind: input, shape index: {}]
  %s3 = inlined_call_operand.vmem [shape: f32[128,10], index: 3, kind: input, shape index: {}]
  %s4 = inlined_call_operand.vmem [shape: f32[1,10], index: 4, kind: input, shape index: {}]
  %s5 = inlined_call_operand.hbm [shape: f32[8,10], index: 5, kind: output, shape index: {}]
  %s6 = sld [smem:[#allocation0]]
  $region30: #{simple_nn_forward.1} parent=0
    _
  %s8 = ssub.s32 1, %s6
  %s9 = scalar_select 0, %s8, %s6
  $region1: #{simple_nn_forward.1} parent=0
    #allocation2 [shape = 'u8[4096]{0}', space=vmem, size = 0x1000, scoped, tag = 'output window, operand 0, single buffered']
    #allocation3 [shape = 's32[1]{0}', space=sflag, size = 0x4, scoped, tag = 'scoped memory for simple_nn_forward.1']
    %10 = vsyncpa [#allocation3], 0
    // Predicated region
    $region2: #{simple_nn_forward.1} parent=1 // pred_check
      _
    $region3: #{simple_nn_forward.1} parent=1 // pred_check_branch
      %12 = sbr.rel (0) target = $region5
    $region4: #{simple_nn_forward.1} parent=1 // pred_region
      _
    $region5: #{simple_nn_forward.1} parent=1 // pred_fallthru
      _
    // Predicated region
    $region6: #{simple_nn_forward.1} parent=1 // pred_check
      _
    $region7: #{simple_nn_forward.1} parent=1 // pred_check_branch
      %14 = sbr.rel (0) target = $region9
    $region8: #{simple_nn_forward.1} parent=1 // pred_region
      _
    $region9: #{simple_nn_forward.1} parent=1 // pred_fallthru
      _
    // Predicated region
    $region10: #{simple_nn_forward.1} parent=1 // pred_check
      _
    $region11: #{simple_nn_forward.1} parent=1 // pred_check_branch
      %16 = sbr.rel (0) target = $region13
    $region12: #{simple_nn_forward.1} parent=1 // pred_region
      _
    $region13: #{simple_nn_forward.1} parent=1 // pred_fallthru
      _
    // Predicated region
    $region14: #{simple_nn_forward.1} parent=1 // pred_check
      _
    $region15: #{simple_nn_forward.1} parent=1 // pred_check_branch
      %18 = sbr.rel (0) target = $region17
    $region16: #{simple_nn_forward.1} parent=1 // pred_region
      _
    $region17: #{simple_nn_forward.1} parent=1 // pred_fallthru
      _
    // Predicated region
    $region18: #{simple_nn_forward.1} parent=1 // pred_check
      _
    $region19: #{simple_nn_forward.1} parent=1 // pred_check_branch
      %20 = sbr.rel (0) target = $region21
    $region20: #{simple_nn_forward.1} parent=1 // pred_region
      _
    $region21: #{simple_nn_forward.1} parent=1 // pred_fallthru
      _
    %v21 = vld [vmem:[%s0] sm:$0xff]
    %v22 = vld [vmem:[%s1] sm:$0xff]
    %v23 = vld [vmem:[%s1 + $0x8] sm:$0xff]
    %v24 = vld [vmem:[%s1 + $0x10] sm:$0xff]
    %v25 = vld [vmem:[%s1 + $0x18] sm:$0xff]
    %v26 = vld [vmem:[%s1 + $0x20] sm:$0xff]
    %v27 = vld [vmem:[%s1 + $0x28] sm:$0xff]
    %v28 = vld [vmem:[%s1 + $0x30] sm:$0xff]
    %v29 = vld [vmem:[%s1 + $0x38] sm:$0xff]
    %v30 = vld [vmem:[%s1 + $0x40] sm:$0xff]
    %v31 = vld [vmem:[%s1 + $0x48] sm:$0xff]
    %v32 = vld [vmem:[%s1 + $0x50] sm:$0xff]
    %v33 = vld [vmem:[%s1 + $0x58] sm:$0xff]
    %v34 = vld [vmem:[%s1 + $0x60] sm:$0xf]
    %v35 = vld [vmem:[%s2] sm:$0x1]
    %v37 = vperm.slane %v35, 0
    %vm39 = vcmask 818176
    %v41 = vsel %vm39, %v21, 0
    %vm43 = vcmask 1043456
    %v45 = vsel %vm43, %v34, 0
    %47 = vmatpush.msra.mxu0 0.0
    %48 = vmatpush.msra.mxu0 0.0
    %49 = vmatpush.msra.mxu0 0.0
    %50 = vmatpush.msra.mxu0 %v45
    %51 = vmatpush.msra.mxu0 %v33
    %52 = vmatpush.msra.mxu0 %v32
    %53 = vmatpush.msra.mxu0 %v31
    %54 = vmatpush.msra.mxu0 %v30
    %55 = vmatpush.msra.mxu0 %v29
    %56 = vmatpush.msra.mxu0 %v28
    %57 = vmatpush.msra.mxu0 %v27
    %58 = vmatpush.msra.mxu0 %v26
    %59 = vmatpush.msra.mxu0 %v25
    %60 = vmatpush.msra.mxu0 %v24
    %61 = vmatpush.msra.mxu0 %v23
    %62 = vmatpush.msra.mxu0 %v22
    %63 = vmatmul.f32.gmra.mxu0 %v41
    %v64 = vpop.f32.mrf.mxu0
    %v65 = vadd.f32 %v37, %v64
    %66 = vdwg.mxu0
    %v67 = vmax.f32 %v65, 0.0
    %v68 = vld [vmem:[%s3] sm:$0xff]
    %v69 = vld [vmem:[%s3 + $0x8] sm:$0xff]
    %v70 = vld [vmem:[%s3 + $0x10] sm:$0xff]
    %v71 = vld [vmem:[%s3 + $0x18] sm:$0xff]
    %v72 = vld [vmem:[%s3 + $0x20] sm:$0xff]
    %v73 = vld [vmem:[%s3 + $0x28] sm:$0xff]
    %v74 = vld [vmem:[%s3 + $0x30] sm:$0xff]
    %v75 = vld [vmem:[%s3 + $0x38] sm:$0xff]
    %v76 = vld [vmem:[%s3 + $0x40] sm:$0xff]
    %v77 = vld [vmem:[%s3 + $0x48] sm:$0xff]
    %v78 = vld [vmem:[%s3 + $0x50] sm:$0xff]
    %v79 = vld [vmem:[%s3 + $0x58] sm:$0xff]
    %v80 = vld [vmem:[%s3 + $0x60] sm:$0xff]
    %v81 = vld [vmem:[%s3 + $0x68] sm:$0xff]
    %v82 = vld [vmem:[%s3 + $0x70] sm:$0xff]
    %v83 = vld [vmem:[%s3 + $0x78] sm:$0xff]
    %v84 = vld [vmem:[%s4] sm:$0x1]
    %v86 = vperm.slane %v84, 0
    %88 = vmatpush.msra.mxu0 %v83
    %89 = vmatpush.msra.mxu0 %v82
    %90 = vmatpush.msra.mxu0 %v81
    %91 = vmatpush.msra.mxu0 %v80
    %92 = vmatpush.msra.mxu0 %v79
    %93 = vmatpush.msra.mxu0 %v78
    %94 = vmatpush.msra.mxu0 %v77
    %95 = vmatpush.msra.mxu0 %v76
    %96 = vmatpush.msra.mxu0 %v75
    %97 = vmatpush.msra.mxu0 %v74
    %98 = vmatpush.msra.mxu0 %v73
    %99 = vmatpush.msra.mxu0 %v72
    %100 = vmatpush.msra.mxu0 %v71
    %101 = vmatpush.msra.mxu0 %v70
    %102 = vmatpush.msra.mxu0 %v69
    %103 = vmatpush.msra.mxu0 %v68
    %104 = vmatmul.f32.gmra.mxu0 %v67
    %v105 = vpop.f32.mrf.mxu0
    %v106 = vadd.f32 %v86, %v105
    %107 = vdwg.mxu0
    %vm108 = vcmask 80896
    %109 = vst.msk [vmem:[#allocation2] sm:$0xff] %vm108, %v106
    // Predicated region
    $region22: #{simple_nn_forward.1} parent=1 // pred_check
      _
    $region23: #{simple_nn_forward.1} parent=1 // pred_check_branch
      %111 = sbr.rel (0) target = $region25
    $region24: #{simple_nn_forward.1} parent=1 // pred_region
      %113 = vsyncadd [#allocation3], 0
      %s115 = sshll.u32 [#allocation2], 4
      %s116 = int_to_ptr.vmem [resolvable:$true] %s115
      %s117 = sshll.u32 %s5, 4
      %s118 = int_to_ptr.hbm [resolvable:$true] %s117
      %120 = dma.vmem_to_hbm [thread:$0]  %s116, 128, %s118, [#allocation3]
    $region25: #{simple_nn_forward.1} parent=1 // pred_fallthru
      _
    // Predicated region
    $region26: #{simple_nn_forward.1} parent=1 // pred_check
      _
    $region27: #{simple_nn_forward.1} parent=1 // pred_check_branch
      %122 = sbr.rel (0) target = $region29
    $region28: #{simple_nn_forward.1} parent=1 // pred_region
      %124 = dma.done [#allocation3], 128
    $region29: #{simple_nn_forward.1} parent=1 // pred_fallthru
      _
    %125 = vsyncpa [#allocation3], 1

</llo_original>
